<compile_context>
chip_gen: v7x
topology: tpu7x:2x2x1
jax: 0.10.0
libtpu: 0.0.40
codegen_flags: <defaults>
</compile_context>

<pallas_src>
import functools

import jax
import jax.numpy as jnp
from jax import lax
from jax.experimental import pallas as pl
from jax.experimental.pallas import tpu as pltpu

_EPS = 1e-5


# ------------------------------ Pallas kernel ------------------------------ #

def _resblock_kernel(x_ref, mask_ref, w1_ref, b1_ref, w2_ref, b2_ref, o_ref,
                     *, wp, compute_dtype):
    """Fused conv3x3+BN+ReLU -> conv3x3+BN + f32 residual + ReLU for one image.

    Layout: channels (padded to a multiple of 8) on sublanes, per-image
    zero-padded flattened spatial (rounded up to a multiple of 128) on lanes.

      x_ref   : (1, Cpad, Lpad) f32   zero-padded input slab
      mask_ref: (1, Lpad)       f32   1.0 on interior pixels, 0.0 on ring/tail
      w1_ref  : (Cpad, 9*Cpad)  conv1 taps packed into K, BN1 scale folded in
      b1_ref  : (Cpad, 1)       f32   BN1 folded bias
      w2_ref  : (Cpad, 9*Cpad)  conv2 taps packed into K, BN2 scale folded in
      b2_ref  : (Cpad, 1)       f32   BN2 folded bias
      o_ref   : (1, Cpad, Lpad) f32   padded-layout output (ring forced to 0)
    """
    lpad = x_ref.shape[-1]
    # Tap offsets of a 3x3 / pad-1 conv in the padded flattened layout.
    shifts = tuple((kh - 1) * wp + (kw - 1) for kh in range(3) for kw in range(3))

    mask = mask_ref[...]                     # (1, Lpad)
    x32 = x_ref[0]                           # (Cpad, Lpad) f32, zero ring/tail

    def conv3x3(act32, w_ref):
        # act32: (Cpad, Lpad) f32 with an exactly-zero padding ring.
        # Pack the 9 taps into the contraction dim: 9 lane-rolled copies stacked
        # on sublanes (tile-aligned, Cpad % 8 == 0), cast once, ONE dot.
        pieces = [act32 if d == 0 else pltpu.roll(act32, shift=(-d) % lpad, axis=1)
                  for d in shifts]
        slab = jnp.concatenate(pieces, axis=0).astype(compute_dtype)  # (9*Cpad, Lpad)
        return jnp.dot(w_ref[...], slab, preferred_element_type=jnp.float32)

    # conv1 + folded BN1 + ReLU; re-zero the ring (it is conv2's implicit padding).
    y1 = jnp.maximum(conv3x3(x32, w1_ref) + b1_ref[...], 0.0) * mask
    # conv2 + folded BN2 + f32 identity residual + ReLU; zero ring for chaining.
    y2 = conv3x3(y1, w2_ref) + b2_ref[...] + x32
    o_ref[0] = (jnp.maximum(y2, 0.0) * mask).astype(o_ref.dtype)


# ------------------------------- JAX wrapper -------------------------------- #

def _fold_scale(gamma, running_var):
    return gamma / jnp.sqrt(running_var + _EPS)


def _round_up(x, m):
    return ((x + m - 1) // m) * m


def _pack_weights(w_oihw, scale, cpad, compute_dtype):
    """(Cout,Cin,3,3) * per-Cout BN scale -> (Cpad, 9*Cpad), K = (kh*3+kw)*Cpad+ci."""
    cout, cin = w_oihw.shape[0], w_oihw.shape[1]
    wf = w_oihw.astype(jnp.float32) * scale[:, None, None, None]
    wf = jnp.pad(wf, ((0, cpad - cout), (0, cpad - cin), (0, 0), (0, 0)))
    return jnp.transpose(wf, (0, 2, 3, 1)).reshape(cpad, 9 * cpad).astype(compute_dtype)


def residual_block_forward(x_nchw, params, *, compute_dtype=jnp.float32):
    """Forward pass of ResidualBlock (stride=1, shortcut=None => identity)."""
    w1, w2 = params["w1"], params["w2"]
    n, cin, h, w = x_nchw.shape
    cout = w1.shape[0]
    assert cin == cout, "identity shortcut requires inchannel == outchannel"

    hp, wp = h + 2, w + 2
    lp = hp * wp
    lpad = _round_up(lp, 128)       # lane-dense, unmasked stores
    cpad = _round_up(cout, 8)       # sublane-tile aligned channel axis

    # Fold BN scale into the conv weights; keep only a per-channel bias.
    s1 = _fold_scale(params["g1"], params["rv1"])
    s2 = _fold_scale(params["g2"], params["rv2"])
    b1 = jnp.pad((params["b1"] - params["rm1"] * s1), (0, cpad - cout))
    b2 = jnp.pad((params["b2"] - params["rm2"] * s2), (0, cpad - cout))
    b1 = b1.reshape(cpad, 1).astype(jnp.float32)
    b2 = b2.reshape(cpad, 1).astype(jnp.float32)
    w1p = _pack_weights(w1, s1, cpad, compute_dtype)     # (Cpad, 9*Cpad)
    w2p = _pack_weights(w2, s2, cpad, compute_dtype)     # (Cpad, 9*Cpad)

    # Zero-padded, flattened, lane/sublane-rounded input slab.  Kept in f32 so
    # the skip connection stays full precision; matmul operands are cast in-kernel.
    xp = jnp.pad(x_nchw.astype(jnp.float32),
                 ((0, 0), (0, cpad - cin), (1, 1), (1, 1)))
    xp = xp.reshape(n, cpad, lp)
    xp = jnp.pad(xp, ((0, 0), (0, 0), (0, lpad - lp)))

    # Interior-pixel mask in the padded layout (rows 1..H, cols 1..W).
    q = jnp.arange(lpad)
    row, col = q // wp, q % wp
    interior = (q < lp) & (row >= 1) & (row <= h) & (col >= 1) & (col <= w)
    mask = interior.astype(jnp.float32)[None, :]          # (1, Lpad)

    kernel = functools.partial(_resblock_kernel, wp=wp, compute_dtype=compute_dtype)
    witem = jnp.dtype(compute_dtype).itemsize
    cost = pl.CostEstimate(
        flops=2 * 2 * 9 * n * h * w * cin * cout,
        transcendentals=0,
        bytes_accessed=(xp.size * 4 + n * cpad * lpad * 4
                        + (w1p.size + w2p.size) * witem
                        + (b1.size + b2.size) * 4 + mask.size * 4),
    )

    out = pl.pallas_call(
        kernel,
        out_shape=jax.ShapeDtypeStruct((n, cpad, lpad), jnp.float32),
        grid=(n,),
        in_specs=[
            pl.BlockSpec((1, cpad, lpad), lambda i: (i, 0, 0)),
            pl.BlockSpec((1, lpad), lambda i: (0, 0)),
            pl.BlockSpec((cpad, 9 * cpad), lambda i: (0, 0)),
            pl.BlockSpec((cpad, 1), lambda i: (0, 0)),
            pl.BlockSpec((cpad, 9 * cpad), lambda i: (0, 0)),
            pl.BlockSpec((cpad, 1), lambda i: (0, 0)),
        ],
        out_specs=pl.BlockSpec((1, cpad, lpad), lambda i: (i, 0, 0)),
        compiler_params=pltpu.CompilerParams(
            dimension_semantics=("parallel",),
            vmem_limit_bytes=32 * 1024 * 1024),
        cost_estimate=cost,
    )(xp, mask, w1p, b1, w2p, b2)

    # Padded lane layout -> NCHW: static slice + reshape only (no pad/crop pass).
    out = out[:, :cout, :lp].reshape(n, cout, hp, wp)[:, :, 1:h + 1, 1:w + 1]
    return out


# ---------------------------- pure-JAX reference ---------------------------- #

def _reference(x_nchw, params):
    dn = ("NCHW", "OIHW", "NCHW")

    def bn(y, g, b, rm, rv):
        inv = g / jnp.sqrt(rv + _EPS)
        return y * inv[None, :, None, None] + (b - rm * inv)[None, :, None, None]

    y = lax.conv_general_dilated(x_nchw, params["w1"], (1, 1), "SAME",
                                 dimension_numbers=dn)
    y = jnp.maximum(bn(y, params["g1"], params["b1"], params["rm1"], params["rv1"]), 0.0)
    y = lax.conv_general_dilated(y, params["w2"], (1, 1), "SAME",
                                 dimension_numbers=dn)
    y = bn(y, params["g2"], params["b2"], params["rm2"], params["rv2"])
    return jnp.maximum(y + x_nchw, 0.0)


# ----------------------------------- main ------------------------------------ #

if __name__ == "__main__":
    key = jax.random.PRNGKey(0)
    N, C, H, W = 2, 4, 16, 16   # inchannel == outchannel, stride=1, identity shortcut
    ks = jax.random.split(key, 11)

    x = jax.random.normal(ks[0], (N, C, H, W), jnp.float32)
    params = {
        "w1": 0.1 * jax.random.normal(ks[1], (C, C, 3, 3), jnp.float32),
        "g1": 1.0 + 0.1 * jax.random.normal(ks[2], (C,), jnp.float32),
        "b1": 0.1 * jax.random.normal(ks[3], (C,), jnp.float32),
        "rm1": 0.1 * jax.random.normal(ks[4], (C,), jnp.float32),
        "rv1": jax.random.uniform(ks[5], (C,), jnp.float32, 0.5, 1.5),
        "w2": 0.1 * jax.random.normal(ks[6], (C, C, 3, 3), jnp.float32),
        "g2": 1.0 + 0.1 * jax.random.normal(ks[7], (C,), jnp.float32),
        "b2": 0.1 * jax.random.normal(ks[8], (C,), jnp.float32),
        "rm2": 0.1 * jax.random.normal(ks[9], (C,), jnp.float32),
        "rv2": jax.random.uniform(ks[10], (C,), jnp.float32, 0.5, 1.5),
    }

    forward = jax.jit(residual_block_forward, static_argnames=("compute_dtype",))
    ref = jax.block_until_ready(_reference(x, params))

    # f32 path: tight check against the XLA reference.
    out_f32 = jax.block_until_ready(forward(x, params, compute_dtype=jnp.float32))
    assert out_f32.shape == (N, C, H, W) and out_f32.dtype == jnp.float32
    err_f32 = float(jnp.max(jnp.abs(out_f32 - ref)))
    assert err_f32 < 1e-4, f"f32 mismatch vs reference: {err_f32}"

    # bf16-operand path (MXU-friendly); residual add stays f32, looser tolerance.
    out_bf16 = jax.block_until_ready(forward(x, params, compute_dtype=jnp.bfloat16))
    err_bf16 = float(jnp.max(jnp.abs(out_bf16 - ref)))
    assert err_bf16 < 5e-2, f"bf16 mismatch vs reference: {err_bf16}"

    print("KERNEL_OK")
</pallas_src>

<mosaic_0001>
module attributes {stable_mosaic.version = 11 : i64} {
  func.func @_resblock_kernel(%arg0: i32, %arg1: memref<1x8x384xf32, #tpu.memory_space<vmem>>, %arg2: memref<1x384xf32, #tpu.memory_space<vmem>>, %arg3: memref<8x72xf32, #tpu.memory_space<vmem>>, %arg4: memref<8x1xf32, #tpu.memory_space<vmem>>, %arg5: memref<8x72xf32, #tpu.memory_space<vmem>>, %arg6: memref<8x1xf32, #tpu.memory_space<vmem>>, %arg7: memref<1x8x384xf32, #tpu.memory_space<vmem>>) attributes {dimension_semantics = [#tpu.dimension_semantics<parallel>], iteration_bounds = array<i64: 2>, scalar_prefetch = 0 : i64, scratch_operands = 0 : i64, tpu.core_type = #tpu.core_type<tc>, window_params = [{transform_indices = @transform_0, window_bounds = array<i64: 1, 8, 384>}, {pipeline_mode = #tpu.pipeline_mode<synchronous>, transform_indices = @transform_1, window_bounds = array<i64: 1, 384>}, {pipeline_mode = #tpu.pipeline_mode<synchronous>, transform_indices = @transform_2, window_bounds = array<i64: 8, 72>}, {pipeline_mode = #tpu.pipeline_mode<synchronous>, transform_indices = @transform_3, window_bounds = array<i64: 8, 1>}, {pipeline_mode = #tpu.pipeline_mode<synchronous>, transform_indices = @transform_4, window_bounds = array<i64: 8, 72>}, {pipeline_mode = #tpu.pipeline_mode<synchronous>, transform_indices = @transform_5, window_bounds = array<i64: 8, 1>}, {transform_indices = @transform_6, window_bounds = array<i64: 1, 8, 384>}]} {
    %c0 = arith.constant 0 : index
    %c0_0 = arith.constant 0 : index
    %0 = vector.load %arg2[%c0, %c0_0] : memref<1x384xf32, #tpu.memory_space<vmem>>, vector<1x384xf32>
    %c0_1 = arith.constant 0 : index
    %c0_2 = arith.constant 0 : index
    %c0_3 = arith.constant 0 : index
    %1 = vector.load %arg1[%c0_1, %c0_2, %c0_3] : memref<1x8x384xf32, #tpu.memory_space<vmem>>, vector<1x8x384xf32>
    %2 = vector.shape_cast %1 : vector<1x8x384xf32> to vector<8x384xf32>
    %c19_i32 = arith.constant 19 : i32
    %3 = tpu.dynamic_rotate %2 by %c19_i32 dim 1 : vector<8x384xf32>, i32 -> vector<8x384xf32>
    %c18_i32 = arith.constant 18 : i32
    %4 = tpu.dynamic_rotate %2 by %c18_i32 dim 1 : vector<8x384xf32>, i32 -> vector<8x384xf32>
    %c17_i32 = arith.constant 17 : i32
    %5 = tpu.dynamic_rotate %2 by %c17_i32 dim 1 : vector<8x384xf32>, i32 -> vector<8x384xf32>
    %c1_i32 = arith.constant 1 : i32
    %6 = tpu.dynamic_rotate %2 by %c1_i32 dim 1 : vector<8x384xf32>, i32 -> vector<8x384xf32>
    %c383_i32 = arith.constant 383 : i32
    %7 = tpu.dynamic_rotate %2 by %c383_i32 dim 1 : vector<8x384xf32>, i32 -> vector<8x384xf32>
    %c367_i32 = arith.constant 367 : i32
    %8 = tpu.dynamic_rotate %2 by %c367_i32 dim 1 : vector<8x384xf32>, i32 -> vector<8x384xf32>
    %c366_i32 = arith.constant 366 : i32
    %9 = tpu.dynamic_rotate %2 by %c366_i32 dim 1 : vector<8x384xf32>, i32 -> vector<8x384xf32>
    %c365_i32 = arith.constant 365 : i32
    %10 = tpu.dynamic_rotate %2 by %c365_i32 dim 1 : vector<8x384xf32>, i32 -> vector<8x384xf32>
    %11 = tpu.concatenate %3, %4, %5, %6, %2, %7, %8, %9, %10 in 0 : vector<8x384xf32>, vector<8x384xf32>, vector<8x384xf32>, vector<8x384xf32>, vector<8x384xf32>, vector<8x384xf32>, vector<8x384xf32>, vector<8x384xf32>, vector<8x384xf32> -> vector<72x384xf32>
    %c0_4 = arith.constant 0 : index
    %c0_5 = arith.constant 0 : index
    %12 = vector.load %arg3[%c0_4, %c0_5] : memref<8x72xf32, #tpu.memory_space<vmem>>, vector<8x72xf32>
    %cst = arith.constant dense<0.000000e+00> : vector<8x384xf32>
    %13 = tpu.matmul %12, %11, %cst {dimension_numbers = #tpu.dot_dimension_numbers<[1], [0], [0], [1], [0, 0, 1, 1], [], []>} : vector<8x72xf32>, vector<72x384xf32>, vector<8x384xf32> -> vector<8x384xf32>
    %c0_6 = arith.constant 0 : index
    %c0_7 = arith.constant 0 : index
    %14 = vector.load %arg4[%c0_6, %c0_7] : memref<8x1xf32, #tpu.memory_space<vmem>>, vector<8x1xf32>
    %15 = vector.broadcast %14 : vector<8x1xf32> to vector<8x384xf32>
    %16 = arith.addf %13, %15 : vector<8x384xf32>
    %cst_8 = arith.constant 0.000000e+00 : f32
    %17 = vector.broadcast %cst_8 : f32 to vector<8x384xf32>
    %18 = arith.maximumf %16, %17 : vector<8x384xf32>
    %19 = vector.broadcast %0 : vector<1x384xf32> to vector<8x384xf32>
    %20 = arith.mulf %18, %19 : vector<8x384xf32>
    %c19_i32_9 = arith.constant 19 : i32
    %21 = tpu.dynamic_rotate %20 by %c19_i32_9 dim 1 : vector<8x384xf32>, i32 -> vector<8x384xf32>
    %c18_i32_10 = arith.constant 18 : i32
    %22 = tpu.dynamic_rotate %20 by %c18_i32_10 dim 1 : vector<8x384xf32>, i32 -> vector<8x384xf32>
    %c17_i32_11 = arith.constant 17 : i32
    %23 = tpu.dynamic_rotate %20 by %c17_i32_11 dim 1 : vector<8x384xf32>, i32 -> vector<8x384xf32>
    %c1_i32_12 = arith.constant 1 : i32
    %24 = tpu.dynamic_rotate %20 by %c1_i32_12 dim 1 : vector<8x384xf32>, i32 -> vector<8x384xf32>
    %c383_i32_13 = arith.constant 383 : i32
    %25 = tpu.dynamic_rotate %20 by %c383_i32_13 dim 1 : vector<8x384xf32>, i32 -> vector<8x384xf32>
    %c367_i32_14 = arith.constant 367 : i32
    %26 = tpu.dynamic_rotate %20 by %c367_i32_14 dim 1 : vector<8x384xf32>, i32 -> vector<8x384xf32>
    %c366_i32_15 = arith.constant 366 : i32
    %27 = tpu.dynamic_rotate %20 by %c366_i32_15 dim 1 : vector<8x384xf32>, i32 -> vector<8x384xf32>
    %c365_i32_16 = arith.constant 365 : i32
    %28 = tpu.dynamic_rotate %20 by %c365_i32_16 dim 1 : vector<8x384xf32>, i32 -> vector<8x384xf32>
    %29 = tpu.concatenate %21, %22, %23, %24, %20, %25, %26, %27, %28 in 0 : vector<8x384xf32>, vector<8x384xf32>, vector<8x384xf32>, vector<8x384xf32>, vector<8x384xf32>, vector<8x384xf32>, vector<8x384xf32>, vector<8x384xf32>, vector<8x384xf32> -> vector<72x384xf32>
    %c0_17 = arith.constant 0 : index
    %c0_18 = arith.constant 0 : index
    %30 = vector.load %arg5[%c0_17, %c0_18] : memref<8x72xf32, #tpu.memory_space<vmem>>, vector<8x72xf32>
    %cst_19 = arith.constant dense<0.000000e+00> : vector<8x384xf32>
    %31 = tpu.matmul %30, %29, %cst_19 {dimension_numbers = #tpu.dot_dimension_numbers<[1], [0], [0], [1], [0, 0, 1, 1], [], []>} : vector<8x72xf32>, vector<72x384xf32>, vector<8x384xf32> -> vector<8x384xf32>
    %c0_20 = arith.constant 0 : index
    %c0_21 = arith.constant 0 : index
    %32 = vector.load %arg6[%c0_20, %c0_21] : memref<8x1xf32, #tpu.memory_space<vmem>>, vector<8x1xf32>
    %33 = vector.broadcast %32 : vector<8x1xf32> to vector<8x384xf32>
    %34 = arith.addf %31, %33 : vector<8x384xf32>
    %35 = arith.addf %34, %2 : vector<8x384xf32>
    %cst_22 = arith.constant 0.000000e+00 : f32
    %36 = vector.broadcast %cst_22 : f32 to vector<8x384xf32>
    %37 = arith.maximumf %35, %36 : vector<8x384xf32>
    %38 = vector.broadcast %0 : vector<1x384xf32> to vector<8x384xf32>
    %39 = arith.mulf %37, %38 : vector<8x384xf32>
    %c0_23 = arith.constant 0 : index
    %c0_24 = arith.constant 0 : index
    %c0_25 = arith.constant 0 : index
    %40 = vector.load %arg7[%c0_23, %c0_24, %c0_25] : memref<1x8x384xf32, #tpu.memory_space<vmem>>, vector<1x8x384xf32>
    %41 = vector.shape_cast %40 : vector<1x8x384xf32> to vector<8x384xf32>
    %42 = vector.shape_cast %39 : vector<8x384xf32> to vector<1x8x384xf32>
    tpu.vector_store %arg7[%c0_23, %c0_24, %c0_25], %42 {strides = array<i32>} : memref<1x8x384xf32, #tpu.memory_space<vmem>>, vector<1x8x384xf32>,
    return
  }
  func.func @transform_0(%arg0: i32) -> (i32, i32, i32) {
    %c0_i32 = arith.constant 0 : i32
    %c0_i32_0 = arith.constant 0 : i32
    %c0_i32_1 = arith.constant 0 : i32
    return %arg0, %c0_i32, %c0_i32_0 : i32, i32, i32
  }
  func.func @transform_1(%arg0: i32) -> (i32, i32) {
    %c0_i32 = arith.constant 0 : i32
    %c0_i32_0 = arith.constant 0 : i32
    %c0_i32_1 = arith.constant 0 : i32
    return %c0_i32, %c0_i32_0 : i32, i32
  }
  func.func @transform_2(%arg0: i32) -> (i32, i32) {
    %c0_i32 = arith.constant 0 : i32
    %c0_i32_0 = arith.constant 0 : i32
    %c0_i32_1 = arith.constant 0 : i32
    return %c0_i32, %c0_i32_0 : i32, i32
  }
  func.func @transform_3(%arg0: i32) -> (i32, i32) {
    %c0_i32 = arith.constant 0 : i32
    %c0_i32_0 = arith.constant 0 : i32
    %c0_i32_1 = arith.constant 0 : i32
    return %c0_i32, %c0_i32_0 : i32, i32
  }
  func.func @transform_4(%arg0: i32) -> (i32, i32) {
    %c0_i32 = arith.constant 0 : i32
    %c0_i32_0 = arith.constant 0 : i32
    %c0_i32_1 = arith.constant 0 : i32
    return %c0_i32, %c0_i32_0 : i32, i32
  }
  func.func @transform_5(%arg0: i32) -> (i32, i32) {
    %c0_i32 = arith.constant 0 : i32
    %c0_i32_0 = arith.constant 0 : i32
    %c0_i32_1 = arith.constant 0 : i32
    return %c0_i32, %c0_i32_0 : i32, i32
  }
  func.func @transform_6(%arg0: i32) -> (i32, i32, i32) {
    %c0_i32 = arith.constant 0 : i32
    %c0_i32_0 = arith.constant 0 : i32
    %c0_i32_1 = arith.constant 0 : i32
    return %arg0, %c0_i32, %c0_i32_0 : i32, i32, i32
  }
}

</mosaic_0001>

<llo_original>
// kernel: residual_block_forward.1
$region0: #{residual_block_forward.1}
  #allocation0 [shape = 'u32[]', space=smem, size = 0x4, offset = 0x4, fixed_abs, tag = 'smem constant byte address 0x4 - core index']
  #allocation1 [shape = 'u32[144,128]{1,0:T(1,128)}', space=vmem, size = 0x12000, scoped, tag = 'internal scratch']
  %s0 = inlined_call_operand.vmem [shape: f32[2,8,384], index: 0, kind: input, shape index: {}]
  %s1 = inlined_call_operand.vmem [shape: f32[1,384], index: 1, kind: input, shape index: {}]
  %s2 = inlined_call_operand.vmem [shape: f32[8,72], index: 2, kind: input, shape index: {}]
  %s3 = inlined_call_operand.vmem [shape: f32[8,1], index: 3, kind: input, shape index: {}]
  %s4 = inlined_call_operand.vmem [shape: f32[8,72], index: 4, kind: input, shape index: {}]
  %s5 = inlined_call_operand.vmem [shape: f32[8,1], index: 5, kind: input, shape index: {}]
  %s6 = inlined_call_operand.vmem [shape: f32[2,8,384], index: 6, kind: output, shape index: {}]
  %s7 = sld [smem:[#allocation0]]
  $region57: #{residual_block_forward.1} parent=0
    _
  %s9 = ssub.s32 1, %s7
  %s10 = scalar_select 0, %s9, %s7
  loop: start=0, step=1, limit=4
  $region2: #{residual_block_forward.1} parent=0 // loop_pre_header
    _
  $region3: #{residual_block_forward.1} parent=0 // loop_header
    %s12 = sphi 0, %s16
    %p13 = scmp.ge.s32.totalorder %s12, 4
    %s22 = sphi 0, %s24
    %s25 = sphi 0, %s22
    %s26 = sphi 0, %s25
    %s42 = sphi 0, %s26
    %s46 = sphi 0, %s46
    %s48 = sphi 0, %s46
    %s49 = sphi 0, %s48
    %s63 = sphi 0, %s49
    %s67 = sphi 0, %s67
    %s69 = sphi 0, %s67
    %s70 = sphi 0, %s69
    %s84 = sphi 0, %s70
    %s88 = sphi 0, %s88
    %s90 = sphi 0, %s88
    %s91 = sphi 0, %s90
    %s105 = sphi 0, %s91
    %s109 = sphi 0, %s109
    %s111 = sphi 0, %s109
    %s112 = sphi 0, %s111
    %s126 = sphi 0, %s112
    %s130 = sphi 0, %s130
    %s132 = sphi 0, %s130
    %s133 = sphi 0, %s132
    %s147 = sphi 0, %s133
    %s153 = sphi 0, %s155
    %s156 = sphi 0, %s153
    %s157 = sphi 0, %s156
    %s173 = sphi 0, %s157
  $region4: #{residual_block_forward.1} parent=0 // loop_header_branch
    %15 = sbr.rel (%p13) target = $region8
  $region5: #{residual_block_forward.1} parent=0 // loop_body
    %s17 = ssub.s32 %s12, 1
    %s18 = ssub.s32 %s12, 2
    %s19 = sadd.s32 %s12, 1
    %s20 = ssub.s32 %s12, %s19
    %p21 = scmp.eq.s32.totalorder %s20, 0
    %s23 = sadd.s32 %s22, 1
    %s24 = scalar_select %p21, %s22, %s23
    %p27 = pneg %p21
    %p28 = scmp.eq.s32.totalorder %s12, 1
    %p29 = por %p27, %p28
    %p30 = scmp.ne.s32.totalorder %s22, %s25
    %p31 = scmp.eq.s32.totalorder %s12, 0
    %p32 = por %p30, %p31
    %p33 = scmp.ne.s32.totalorder %s22, %s25
    %p34 = scmp.eq.s32.totalorder %s17, 1
    %p35 = por %p33, %p34
    %p36 = scmp.ne.s32.totalorder %s25, %s26
    %p37 = scmp.eq.s32.totalorder %s17, 0
    %p38 = por %p36, %p37
    %p39 = scmp.ne.s32.totalorder %s25, %s26
    %p40 = scmp.eq.s32.totalorder %s18, 1
    %p41 = por %p39, %p40
    %p43 = scmp.ne.s32.totalorder %s26, %s42
    %p44 = scmp.eq.s32.totalorder %s18, 0
    %p45 = por %p43, %p44
    %s47 = sadd.s32 %s46, 1
    %p50 = scmp.eq.s32.totalorder %s12, 1
    %p51 = scmp.ne.s32.totalorder %s46, %s48
    %p52 = scmp.eq.s32.totalorder %s12, 0
    %p53 = por %p51, %p52
    %p54 = scmp.ne.s32.totalorder %s46, %s48
    %p55 = scmp.eq.s32.totalorder %s17, 1
    %p56 = por %p54, %p55
    %p57 = scmp.ne.s32.totalorder %s48, %s49
    %p58 = scmp.eq.s32.totalorder %s17, 0
    %p59 = por %p57, %p58
    %p60 = scmp.ne.s32.totalorder %s48, %s49
    %p61 = scmp.eq.s32.totalorder %s18, 1
    %p62 = por %p60, %p61
    %p64 = scmp.ne.s32.totalorder %s49, %s63
    %p65 = scmp.eq.s32.totalorder %s18, 0
    %p66 = por %p64, %p65
    %s68 = sadd.s32 %s67, 1
    %p71 = scmp.eq.s32.totalorder %s12, 1
    %p72 = scmp.ne.s32.totalorder %s67, %s69
    %p73 = scmp.eq.s32.totalorder %s12, 0
    %p74 = por %p72, %p73
    %p75 = scmp.ne.s32.totalorder %s67, %s69
    %p76 = scmp.eq.s32.totalorder %s17, 1
    %p77 = por %p75, %p76
    %p78 = scmp.ne.s32.totalorder %s69, %s70
    %p79 = scmp.eq.s32.totalorder %s17, 0
    %p80 = por %p78, %p79
    %p81 = scmp.ne.s32.totalorder %s69, %s70
    %p82 = scmp.eq.s32.totalorder %s18, 1
    %p83 = por %p81, %p82
    %p85 = scmp.ne.s32.totalorder %s70, %s84
    %p86 = scmp.eq.s32.totalorder %s18, 0
    %p87 = por %p85, %p86
    %s89 = sadd.s32 %s88, 1
    %p92 = scmp.eq.s32.totalorder %s12, 1
    %p93 = scmp.ne.s32.totalorder %s88, %s90
    %p94 = scmp.eq.s32.totalorder %s12, 0
    %p95 = por %p93, %p94
    %p96 = scmp.ne.s32.totalorder %s88, %s90
    %p97 = scmp.eq.s32.totalorder %s17, 1
    %p98 = por %p96, %p97
    %p99 = scmp.ne.s32.totalorder %s90, %s91
    %p100 = scmp.eq.s32.totalorder %s17, 0
    %p101 = por %p99, %p100
    %p102 = scmp.ne.s32.totalorder %s90, %s91
    %p103 = scmp.eq.s32.totalorder %s18, 1
    %p104 = por %p102, %p103
    %p106 = scmp.ne.s32.totalorder %s91, %s105
    %p107 = scmp.eq.s32.totalorder %s18, 0
    %p108 = por %p106, %p107
    %s110 = sadd.s32 %s109, 1
    %p113 = scmp.eq.s32.totalorder %s12, 1
    %p114 = scmp.ne.s32.totalorder %s109, %s111
    %p115 = scmp.eq.s32.totalorder %s12, 0
    %p116 = por %p114, %p115
    %p117 = scmp.ne.s32.totalorder %s109, %s111
    %p118 = scmp.eq.s32.totalorder %s17, 1
    %p119 = por %p117, %p118
    %p120 = scmp.ne.s32.totalorder %s111, %s112
    %p121 = scmp.eq.s32.totalorder %s17, 0
    %p122 = por %p120, %p121
    %p123 = scmp.ne.s32.totalorder %s111, %s112
    %p124 = scmp.eq.s32.totalorder %s18, 1
    %p125 = por %p123, %p124
    %p127 = scmp.ne.s32.totalorder %s112, %s126
    %p128 = scmp.eq.s32.totalorder %s18, 0
    %p129 = por %p127, %p128
    %s131 = sadd.s32 %s130, 1
    %p134 = scmp.eq.s32.totalorder %s12, 1
    %p135 = scmp.ne.s32.totalorder %s130, %s132
    %p136 = scmp.eq.s32.totalorder %s12, 0
    %p137 = por %p135, %p136
    %p138 = scmp.ne.s32.totalorder %s130, %s132
    %p139 = scmp.eq.s32.totalorder %s17, 1
    %p140 = por %p138, %p139
    %p141 = scmp.ne.s32.totalorder %s132, %s133
    %p142 = scmp.eq.s32.totalorder %s17, 0
    %p143 = por %p141, %p142
    %p144 = scmp.ne.s32.totalorder %s132, %s133
    %p145 = scmp.eq.s32.totalorder %s18, 1
    %p146 = por %p144, %p145
    %p148 = scmp.ne.s32.totalorder %s133, %s147
    %p149 = scmp.eq.s32.totalorder %s18, 0
    %p150 = por %p148, %p149
    %s151 = ssub.s32 %s12, %s19
    %p152 = scmp.eq.s32.totalorder %s151, 0
    %s154 = sadd.s32 %s153, 1
    %s155 = scalar_select %p152, %s153, %s154
    %p158 = pneg %p152
    %p159 = scmp.eq.s32.totalorder %s12, 1
    %p160 = por %p158, %p159
    %p161 = scmp.ne.s32.totalorder %s153, %s156
    %p162 = scmp.eq.s32.totalorder %s12, 0
    %p163 = por %p161, %p162
    %p164 = scmp.ne.s32.totalorder %s153, %s156
    %p165 = scmp.eq.s32.totalorder %s17, 1
    %p166 = por %p164, %p165
    %p167 = scmp.ne.s32.totalorder %s156, %s157
    %p168 = scmp.eq.s32.totalorder %s17, 0
    %p169 = por %p167, %p168
    %p170 = scmp.ne.s32.totalorder %s156, %s157
    %p171 = scmp.eq.s32.totalorder %s18, 1
    %p172 = por %p170, %p171
    %p174 = scmp.ne.s32.totalorder %s157, %s173
    %p175 = scmp.eq.s32.totalorder %s18, 0
    %p176 = por %p174, %p175
    %p177 = scmp.le.s32.totalorder 1, %s12
    %p178 = scmp.lt.s32.totalorder %s12, 3
    %p179 = pnand %p177, %p178
    %p180 = pneg %p179
    // Predicated region
    $region9: #{residual_block_forward.1} parent=5 // pred_check
      _
    $region10: #{residual_block_forward.1} parent=5 // pred_check_branch
      %182 = sbr.rel (%p179) target = $region12
    $region11: #{residual_block_forward.1} parent=5 // pred_region
      %s183 = ssub.s32 %s12, 1
      // Predicated region
      $region13: #{residual_block_forward.1} parent=11 // pred_check
        %p184 = pneg %p59
      $region14: #{residual_block_forward.1} parent=11 // pred_check_branch
        %186 = sbr.rel (%p184) target = $region16
      $region15: #{residual_block_forward.1} parent=11 // pred_region
        _
      $region16: #{residual_block_forward.1} parent=11 // pred_fallthru
        _
      // Predicated region
      $region17: #{residual_block_forward.1} parent=11 // pred_check
        %p187 = pneg %p80
      $region18: #{residual_block_forward.1} parent=11 // pred_check_branch
        %189 = sbr.rel (%p187) target = $region20
      $region19: #{residual_block_forward.1} parent=11 // pred_region
        _
      $region20: #{residual_block_forward.1} parent=11 // pred_fallthru
        _
      // Predicated region
      $region21: #{residual_block_forward.1} parent=11 // pred_check
        %p190 = pneg %p101
      $region22: #{residual_block_forward.1} parent=11 // pred_check_branch
        %192 = sbr.rel (%p190) target = $region24
      $region23: #{residual_block_forward.1} parent=11 // pred_region
        _
      $region24: #{residual_block_forward.1} parent=11 // pred_fallthru
        _
      // Predicated region
      $region25: #{residual_block_forward.1} parent=11 // pred_check
        %p193 = pneg %p122
      $region26: #{residual_block_forward.1} parent=11 // pred_check_branch
        %195 = sbr.rel (%p193) target = $region28
      $region27: #{residual_block_forward.1} parent=11 // pred_region
        _
      $region28: #{residual_block_forward.1} parent=11 // pred_fallthru
        _
      // Predicated region
      $region29: #{residual_block_forward.1} parent=11 // pred_check
        %p196 = pneg %p143
      $region30: #{residual_block_forward.1} parent=11 // pred_check_branch
        %198 = sbr.rel (%p196) target = $region32
      $region31: #{residual_block_forward.1} parent=11 // pred_region
        _
      $region32: #{residual_block_forward.1} parent=11 // pred_fallthru
        _
    $region12: #{residual_block_forward.1} parent=5 // pred_fallthru
      _
    %p199 = scmp.lt.s32.totalorder %s12, 2
    // Predicated region
    $region33: #{residual_block_forward.1} parent=5 // pred_check
      %p200 = pneg %p199
    $region34: #{residual_block_forward.1} parent=5 // pred_check_branch
      %202 = sbr.rel (%p200) target = $region36
    $region35: #{residual_block_forward.1} parent=5 // pred_region
      // Predicated region
      $region37: #{residual_block_forward.1} parent=35 // pred_check
        %p203 = pneg %p32
      $region38: #{residual_block_forward.1} parent=35 // pred_check_branch
        %205 = sbr.rel (%p203) target = $region40
      $region39: #{residual_block_forward.1} parent=35 // pred_region
        %p206 = scmp.lt.s32.totalorder %s12, 1
        %s207 = scalar_select %p206, %s12, 1
        %s208 = smul.addr %s207, 3
        %s209 = smul.addr %s208, 8
        %s210 = scalar_lea.vmem %s0, %s209
      $region40: #{residual_block_forward.1} parent=35 // pred_fallthru
        _
    $region36: #{residual_block_forward.1} parent=5 // pred_fallthru
      _
    %p211 = scmp.le.s32.totalorder 1, %s12
    %p212 = scmp.lt.s32.totalorder %s12, 3
    %p213 = pnand %p211, %p212
    %p214 = pneg %p213
    // Predicated region
    $region41: #{residual_block_forward.1} parent=5 // pred_check
      _
    $region42: #{residual_block_forward.1} parent=5 // pred_check_branch
      %216 = sbr.rel (%p213) target = $region44
    $region43: #{residual_block_forward.1} parent=5 // pred_region
      %s217 = ssub.s32 %s12, 1
      %p218 = scmp.lt.s32.totalorder %s17, 1
      %s219 = scalar_select %p218, %s17, 1
      %s220 = smul.addr %s219, 3
      %s221 = smul.addr %s220, 8
      %s222 = scalar_lea.vmem %s0, %s221
      %p223 = pneg %p38
      %p224 = pneg %p35
      %p225 = pneg %p59
      %p226 = pneg %p56
      %p227 = pneg %p80
      %p228 = pneg %p77
      %p229 = pneg %p101
      %p230 = pneg %p98
      %p231 = pneg %p122
      %p232 = pneg %p119
      %p233 = pneg %p143
      %p234 = pneg %p140
      %p235 = pneg %p169
      %p236 = pneg %p166
      %p237 = scmp.lt.s32.totalorder %s17, 1
      %s238 = scalar_select %p237, %s17, 1
      %s239 = smul.addr %s238, 3
      %s240 = smul.addr %s239, 8
      %s241 = scalar_lea.vmem %s6, %s240
      %p242 = scmp.lt.s32.totalorder %s17, 1
      %s243 = scalar_select %p242, %s17, 1
      %s244 = smul.addr %s243, 3
      %s245 = smul.addr %s244, 8
      %s246 = scalar_lea.vmem %s0, %s245
      %p247 = scmp.lt.s32.totalorder %s17, 1
      %s248 = scalar_select %p247, %s17, 1
      %s249 = smul.addr %s248, 3
      %s250 = smul.addr %s249, 8
      %s251 = scalar_lea.vmem %s6, %s250
      %v252 = vld [vmem:[%s1] sm:$0x7]
      %v253 = vld [vmem:[%s246] sm:$0xff]
      %v254 = vld [vmem:[%s246 + $0x8] sm:$0xff]
      %v255 = vld [vmem:[%s246 + $0x10] sm:$0xff]
      %256 = vrot.lane.b32.xlu0 %v253, 19
      %v257 = vpop.permute.xlu0 %256
      %258 = vrot.lane.b32.xlu0 %v254, 19
      %v259 = vpop.permute.xlu0 %258
      %260 = vrot.lane.b32.xlu0 %v255, 19
      %v261 = vpop.permute.xlu0 %260
      %v262 = vlaneseq
      %v263 = vand.u32 %v262, 127
      %vm264 = vcmp.lt.s32.totalorder %v263, 19
      %v265 = vsel %vm264, %v259, %v261
      %v266 = vsel %vm264, %v257, %v259
      %v267 = vsel %vm264, %v261, %v257
      %268 = vrot.lane.b32.xlu0 %v253, 18
      %v269 = vpop.permute.xlu0 %268
      %270 = vrot.lane.b32.xlu0 %v254, 18
      %v271 = vpop.permute.xlu0 %270
      %272 = vrot.lane.b32.xlu0 %v255, 18
      %v273 = vpop.permute.xlu0 %272
      %vm274 = vcmp.lt.s32.totalorder %v263, 18
      %v275 = vsel %vm274, %v271, %v273
      %v276 = vsel %vm274, %v269, %v271
      %v277 = vsel %vm274, %v273, %v269
      %278 = vrot.lane.b32.xlu0 %v253, 17
      %v279 = vpop.permute.xlu0 %278
      %280 = vrot.lane.b32.xlu0 %v254, 17
      %v281 = vpop.permute.xlu0 %280
      %282 = vrot.lane.b32.xlu0 %v255, 17
      %v283 = vpop.permute.xlu0 %282
      %vm284 = vcmp.lt.s32.totalorder %v263, 17
      %v285 = vsel %vm284, %v281, %v283
      %v286 = vsel %vm284, %v279, %v281
      %v287 = vsel %vm284, %v283, %v279
      %288 = vrot.lane.b32.xlu0 %v253, 1
      %v289 = vpop.permute.xlu0 %288
      %290 = vrot.lane.b32.xlu0 %v254, 1
      %v291 = vpop.permute.xlu0 %290
      %292 = vrot.lane.b32.xlu0 %v255, 1
      %v293 = vpop.permute.xlu0 %292
      %vm294 = vcmp.lt.s32.totalorder %v263, 1
      %v295 = vsel %vm294, %v291, %v293
      %v296 = vsel %vm294, %v289, %v291
      %v297 = vsel %vm294, %v293, %v289
      %298 = vrot.lane.b32.xlu0 %v253, 127
      %v299 = vpop.permute.xlu0 %298
      %300 = vrot.lane.b32.xlu0 %v254, 127
      %v301 = vpop.permute.xlu0 %300
      %302 = vrot.lane.b32.xlu0 %v255, 127
      %v303 = vpop.permute.xlu0 %302
      %vm304 = vcmp.lt.s32.totalorder %v263, 127
      %v305 = vsel %vm304, %v301, %v303
      %v306 = vsel %vm304, %v299, %v301
      %v307 = vsel %vm304, %v303, %v299
      %308 = vrot.lane.b32.xlu0 %v253, 111
      %v309 = vpop.permute.xlu0 %308
      %310 = vrot.lane.b32.xlu0 %v254, 111
      %v311 = vpop.permute.xlu0 %310
      %312 = vrot.lane.b32.xlu0 %v255, 111
      %v313 = vpop.permute.xlu0 %312
      %vm314 = vcmp.lt.s32.totalorder %v263, 111
      %v315 = vsel %vm314, %v311, %v313
      %v316 = vsel %vm314, %v309, %v311
      %v317 = vsel %vm314, %v313, %v309
      %318 = vrot.lane.b32.xlu0 %v253, 110
      %v319 = vpop.permute.xlu0 %318
      %320 = vrot.lane.b32.xlu0 %v254, 110
      %v321 = vpop.permute.xlu0 %320
      %322 = vrot.lane.b32.xlu0 %v255, 110
      %v323 = vpop.permute.xlu0 %322
      %vm324 = vcmp.lt.s32.totalorder %v263, 110
      %v325 = vsel %vm324, %v321, %v323
      %v326 = vsel %vm324, %v319, %v321
      %v327 = vsel %vm324, %v323, %v319
      %328 = vrot.lane.b32.xlu0 %v253, 109
      %v329 = vpop.permute.xlu0 %328
      %330 = vrot.lane.b32.xlu0 %v254, 109
      %v331 = vpop.permute.xlu0 %330
      %332 = vrot.lane.b32.xlu0 %v255, 109
      %v333 = vpop.permute.xlu0 %332
      %vm334 = vcmp.lt.s32.totalorder %v263, 109
      %v335 = vsel %vm334, %v331, %v333
      %v336 = vsel %vm334, %v329, %v331
      %v337 = vsel %vm334, %v333, %v329
      %v338 = vld [vmem:[%s2] sm:$0xff]
      %v339 = vld [vmem:[%s3] sm:$0xff]
      %341 = vset.pattern.permute.xlu0 0
      %342 = vperm.xlu0 %341, %v339
      %v343 = vpop.permute.xlu0 %342
      %vm345 = vcmask 588800
      %v347 = vsel %vm345, %v338, 0
      %349 = vmatprep.subr.mxu0 %v266
      %350 = vmatpush1.msra.mxu0 %v267
      %351 = vmatprep.subr.mxu0 %v276
      %352 = vmatpush1.msra.mxu0 %v277
      %353 = vmatprep.subr.mxu0 %v286
      %354 = vmatpush1.msra.mxu0 %v287
      %355 = vmatprep.subr.mxu0 %v296
      %356 = vmatpush1.msra.mxu0 %v297
      %357 = vmatprep.subr.mxu0 %v254
      %358 = vmatpush1.msra.mxu0 %v253
      %359 = vmatprep.subr.mxu0 %v305
      %360 = vmatpush1.msra.mxu0 %v306
      %361 = vmatprep.subr.mxu0 %v315
      %362 = vmatpush1.msra.mxu0 %v316
      %363 = vmatprep.subr.mxu0 %v325
      %364 = vmatpush1.msra.mxu0 %v326
      %365 = vmatprep.subr.mxu0 %v335
      %366 = vmatpush1.msra.mxu0 %v336
      %367 = vmatprep.subr.mxu0 0.0
      %368 = vmatpush1.msra.mxu0 0.0
      %369 = vmatprep.subr.mxu0 0.0
      %370 = vmatpush1.msra.mxu0 0.0
      %371 = vmatprep.subr.mxu0 0.0
      %372 = vmatpush1.msra.mxu0 0.0
      %373 = vmatprep.subr.mxu0 0.0
      %374 = vmatpush1.msra.mxu0 0.0
      %375 = vmatprep.subr.mxu0 0.0
      %376 = vmatpush1.msra.mxu0 0.0
      %377 = vmatprep.subr.mxu0 0.0
      %378 = vmatpush1.msra.mxu0 0.0
      %379 = vmatprep.subr.mxu0 0.0
      %380 = vmatpush1.msra.mxu0 0.0
      %381 = vmatprep.subr.mxu0 0.0
      %382 = vmatpush1.msra.mxu0 0.0
      %383 = vmatprep.subr.mxu0 0.0
      %384 = vmatpush1.msra.mxu0 0.0
      %385 = vmatprep.subr.mxu0 0.0
      %386 = vmatpush1.msra.mxu0 0.0
      %387 = vmatprep.subr.mxu0 0.0
      %388 = vmatpush1.msra.mxu0 0.0
      %389 = vmatprep.subr.mxu0 0.0
      %390 = vmatpush1.msra.mxu0 0.0
      %391 = vmatprep.subr.mxu0 0.0
      %392 = vmatpush1.msra.mxu0 0.0
      %393 = vmatprep.subr.mxu0 0.0
      %394 = vmatpush1.msra.mxu0 0.0
      %395 = vmatprep.subr.mxu0 0.0
      %396 = vmatpush1.msra.mxu0 0.0
      %397 = vmatprep.subr.mxu0 0.0
      %398 = vmatpush1.msra.mxu0 0.0
      %399 = vmatprep.subr.mxu0 0.0
      %400 = vmatpush1.msra.mxu0 0.0
      %401 = vmatprep.subr.mxu0 0.0
      %402 = vmatpush1.msra.mxu0 0.0
      %403 = vmatprep.subr.mxu0 0.0
      %404 = vmatpush1.msra.mxu0 0.0
      %405 = vmatprep.subr.mxu0 0.0
      %406 = vmatpush1.msra.mxu0 0.0
      %407 = vmatprep.subr.mxu0 0.0
      %408 = vmatpush1.msra.mxu0 0.0
      %409 = vmatprep.subr.mxu0 0.0
      %410 = vmatpush1.msra.mxu0 0.0
      %411 = vmatprep.subr.mxu0 0.0
      %412 = vmatpush1.msra.mxu0 0.0
      %413 = vmatprep.mubr.f32.mxu0 0.0
      %414 = vmatmul.mubr.f32.gmra.mrb[0].mxu0 %v347
      %v415 = vpop.f32.mrb[0].mxu0
      %v416 = vadd.f32 %v343, %v415
      %v417 = vpop.f32.mrb[0].mxu0
      %v418 = vadd.f32 %v343, %v417
      %419 = vdwg.mxu0
      %420 = vmatprep.subr.mxu0 0.0
      %421 = vmatpush1.msra.mxu0 %v265
      %422 = vmatprep.subr.mxu0 0.0
      %423 = vmatpush1.msra.mxu0 %v275
      %424 = vmatprep.subr.mxu0 0.0
      %425 = vmatpush1.msra.mxu0 %v285
      %426 = vmatprep.subr.mxu0 0.0
      %427 = vmatpush1.msra.mxu0 %v295
      %428 = vmatprep.subr.mxu0 0.0
      %429 = vmatpush1.msra.mxu0 %v255
      %430 = vmatprep.subr.mxu0 0.0
      %431 = vmatpush1.msra.mxu0 %v307
      %432 = vmatprep.subr.mxu0 0.0
      %433 = vmatpush1.msra.mxu0 %v317
      %434 = vmatprep.subr.mxu0 0.0
      %435 = vmatpush1.msra.mxu0 %v327
      %436 = vmatprep.subr.mxu0 0.0
      %437 = vmatpush1.msra.mxu0 %v337
      %438 = vmatprep.subr.mxu0 0.0
      %439 = vmatpush1.msra.mxu0 0.0
      %440 = vmatprep.subr.mxu0 0.0
      %441 = vmatpush1.msra.mxu0 0.0
      %442 = vmatprep.subr.mxu0 0.0
      %443 = vmatpush1.msra.mxu0 0.0
      %444 = vmatprep.subr.mxu0 0.0
      %445 = vmatpush1.msra.mxu0 0.0
      %446 = vmatprep.subr.mxu0 0.0
      %447 = vmatpush1.msra.mxu0 0.0
      %448 = vmatprep.subr.mxu0 0.0
      %449 = vmatpush1.msra.mxu0 0.0
      %450 = vmatprep.subr.mxu0 0.0
      %451 = vmatpush1.msra.mxu0 0.0
      %452 = vmatprep.subr.mxu0 0.0
      %453 = vmatpush1.msra.mxu0 0.0
      %454 = vmatprep.subr.mxu0 0.0
      %455 = vmatpush1.msra.mxu0 0.0
      %456 = vmatprep.subr.mxu0 0.0
      %457 = vmatpush1.msra.mxu0 0.0
      %458 = vmatprep.subr.mxu0 0.0
      %459 = vmatpush1.msra.mxu0 0.0
      %460 = vmatprep.subr.mxu0 0.0
      %461 = vmatpush1.msra.mxu0 0.0
      %462 = vmatprep.subr.mxu0 0.0
      %463 = vmatpush1.msra.mxu0 0.0
      %464 = vmatprep.subr.mxu0 0.0
      %465 = vmatpush1.msra.mxu0 0.0
      %466 = vmatprep.subr.mxu0 0.0
      %467 = vmatpush1.msra.mxu0 0.0
      %468 = vmatprep.subr.mxu0 0.0
      %469 = vmatpush1.msra.mxu0 0.0
      %470 = vmatprep.subr.mxu0 0.0
      %471 = vmatpush1.msra.mxu0 0.0
      %472 = vmatprep.subr.mxu0 0.0
      %473 = vmatpush1.msra.mxu0 0.0
      %474 = vmatprep.subr.mxu0 0.0
      %475 = vmatpush1.msra.mxu0 0.0
      %476 = vmatprep.subr.mxu0 0.0
      %477 = vmatpush1.msra.mxu0 0.0
      %478 = vmatprep.subr.mxu0 0.0
      %479 = vmatpush1.msra.mxu0 0.0
      %480 = vmatprep.subr.mxu0 0.0
      %481 = vmatpush1.msra.mxu0 0.0
      %482 = vmatprep.subr.mxu0 0.0
      %483 = vmatpush1.msra.mxu0 0.0
      %484 = vmatprep.mubr.f32.mxu0 0.0
      %485 = vmatmul.mubr.f32.gmra.mrb[0].mxu0 %v347
      %v486 = vpop.f32.mrb[0].mxu0
      %v487 = vadd.f32 %v343, %v486
      %v488 = vpop.f32.mrb[0].mxu0
      %489 = vdwg.mxu0
      %v490 = vmax.f32 %v416, 0.0
      %v491 = vmax.f32 %v418, 0.0
      %v492 = vmax.f32 %v487, 0.0
      %v494 = vlaneseq
      %v495 = vshrl.u32 %v494, 7
      %v496 = vsub.s32 0, %v495
      %v497 = vrot.slane %v252, %v496
      %v498 = vlaneseq
      %v499 = vshrl.u32 %v498, 7
      %v500 = vsub.s32 1, %v499
      %v501 = vrot.slane %v252, %v500
      %v502 = vlaneseq
      %v503 = vshrl.u32 %v502, 7
      %v504 = vsub.s32 2, %v503
      %v505 = vrot.slane %v252, %v504
      %v509 = vmul.f32 %v490, %v497
      %v510 = vmul.f32 %v491, %v501
      %v511 = vmul.f32 %v492, %v505
      %512 = vrot.lane.b32.xlu0 %v509, 19
      %v513 = vpop.permute.xlu0 %512
      %514 = vrot.lane.b32.xlu0 %v510, 19
      %v515 = vpop.permute.xlu0 %514
      %516 = vrot.lane.b32.xlu0 %v511, 19
      %v517 = vpop.permute.xlu0 %516
      %v518 = vsel %vm264, %v515, %v517
      %v519 = vsel %vm264, %v513, %v515
      %v520 = vsel %vm264, %v517, %v513
      %521 = vrot.lane.b32.xlu0 %v509, 18
      %v522 = vpop.permute.xlu0 %521
      %523 = vrot.lane.b32.xlu0 %v510, 18
      %v524 = vpop.permute.xlu0 %523
      %525 = vrot.lane.b32.xlu0 %v511, 18
      %v526 = vpop.permute.xlu0 %525
      %v527 = vsel %vm274, %v524, %v526
      %v528 = vsel %vm274, %v522, %v524
      %v529 = vsel %vm274, %v526, %v522
      %530 = vrot.lane.b32.xlu0 %v509, 17
      %v531 = vpop.permute.xlu0 %530
      %532 = vrot.lane.b32.xlu0 %v510, 17
      %v533 = vpop.permute.xlu0 %532
      %534 = vrot.lane.b32.xlu0 %v511, 17
      %v535 = vpop.permute.xlu0 %534
      %v536 = vsel %vm284, %v533, %v535
      %v537 = vsel %vm284, %v531, %v533
      %v538 = vsel %vm284, %v535, %v531
      %539 = vrot.lane.b32.xlu0 %v509, 1
      %v540 = vpop.permute.xlu0 %539
      %541 = vrot.lane.b32.xlu0 %v510, 1
      %v542 = vpop.permute.xlu0 %541
      %543 = vrot.lane.b32.xlu0 %v511, 1
      %v544 = vpop.permute.xlu0 %543
      %v545 = vsel %vm294, %v542, %v544
      %v546 = vsel %vm294, %v540, %v542
      %v547 = vsel %vm294, %v544, %v540
      %548 = vrot.lane.b32.xlu0 %v509, 127
      %v549 = vpop.permute.xlu0 %548
      %550 = vrot.lane.b32.xlu0 %v510, 127
      %v551 = vpop.permute.xlu0 %550
      %552 = vrot.lane.b32.xlu0 %v511, 127
      %v553 = vpop.permute.xlu0 %552
      %v554 = vsel %vm304, %v551, %v553
      %v555 = vsel %vm304, %v549, %v551
      %v556 = vsel %vm304, %v553, %v549
      %557 = vrot.lane.b32.xlu0 %v509, 111
      %v558 = vpop.permute.xlu0 %557
      %559 = vrot.lane.b32.xlu0 %v510, 111
      %v560 = vpop.permute.xlu0 %559
      %561 = vrot.lane.b32.xlu0 %v511, 111
      %v562 = vpop.permute.xlu0 %561
      %v563 = vsel %vm314, %v560, %v562
      %v564 = vsel %vm314, %v558, %v560
      %v565 = vsel %vm314, %v562, %v558
      %566 = vrot.lane.b32.xlu0 %v509, 110
      %v567 = vpop.permute.xlu0 %566
      %568 = vrot.lane.b32.xlu0 %v510, 110
      %v569 = vpop.permute.xlu0 %568
      %570 = vrot.lane.b32.xlu0 %v511, 110
      %v571 = vpop.permute.xlu0 %570
      %v572 = vsel %vm324, %v569, %v571
      %v573 = vsel %vm324, %v567, %v569
      %v574 = vsel %vm324, %v571, %v567
      %575 = vrot.lane.b32.xlu0 %v509, 109
      %v576 = vpop.permute.xlu0 %575
      %577 = vrot.lane.b32.xlu0 %v510, 109
      %v578 = vpop.permute.xlu0 %577
      %579 = vrot.lane.b32.xlu0 %v511, 109
      %v580 = vpop.permute.xlu0 %579
      %v581 = vsel %vm334, %v578, %v580
      %v582 = vsel %vm334, %v576, %v578
      %v583 = vsel %vm334, %v580, %v576
      %v584 = vld [vmem:[%s4] sm:$0xff]
      %v585 = vld [vmem:[%s5] sm:$0xff]
      %587 = vset.pattern.permute.xlu0 0
      %588 = vperm.xlu0 %587, %v585
      %v589 = vpop.permute.xlu0 %588
      %v592 = vsel %vm345, %v584, 0
      %594 = vmatprep.subr.mxu0 %v519
      %595 = vmatpush1.msra.mxu0 %v520
      %596 = vmatprep.subr.mxu0 %v528
      %597 = vmatpush1.msra.mxu0 %v529
      %598 = vmatprep.subr.mxu0 %v537
      %599 = vmatpush1.msra.mxu0 %v538
      %600 = vmatprep.subr.mxu0 %v546
      %601 = vmatpush1.msra.mxu0 %v547
      %602 = vmatprep.subr.mxu0 %v510
      %603 = vmatpush1.msra.mxu0 %v509
      %604 = vmatprep.subr.mxu0 %v554
      %605 = vmatpush1.msra.mxu0 %v555
      %606 = vmatprep.subr.mxu0 %v563
      %607 = vmatpush1.msra.mxu0 %v564
      %608 = vmatprep.subr.mxu0 %v572
      %609 = vmatpush1.msra.mxu0 %v573
      %610 = vmatprep.subr.mxu0 %v581
      %611 = vmatpush1.msra.mxu0 %v582
      %612 = vmatprep.subr.mxu0 0.0
      %613 = vmatpush1.msra.mxu0 0.0
      %614 = vmatprep.subr.mxu0 0.0
      %615 = vmatpush1.msra.mxu0 0.0
      %616 = vmatprep.subr.mxu0 0.0
      %617 = vmatpush1.msra.mxu0 0.0
      %618 = vmatprep.subr.mxu0 0.0
      %619 = vmatpush1.msra.mxu0 0.0
      %620 = vmatprep.subr.mxu0 0.0
      %621 = vmatpush1.msra.mxu0 0.0
      %622 = vmatprep.subr.mxu0 0.0
      %623 = vmatpush1.msra.mxu0 0.0
      %624 = vmatprep.subr.mxu0 0.0
      %625 = vmatpush1.msra.mxu0 0.0
      %626 = vmatprep.subr.mxu0 0.0
      %627 = vmatpush1.msra.mxu0 0.0
      %628 = vmatprep.subr.mxu0 0.0
      %629 = vmatpush1.msra.mxu0 0.0
      %630 = vmatprep.subr.mxu0 0.0
      %631 = vmatpush1.msra.mxu0 0.0
      %632 = vmatprep.subr.mxu0 0.0
      %633 = vmatpush1.msra.mxu0 0.0
      %634 = vmatprep.subr.mxu0 0.0
      %635 = vmatpush1.msra.mxu0 0.0
      %636 = vmatprep.subr.mxu0 0.0
      %637 = vmatpush1.msra.mxu0 0.0
      %638 = vmatprep.subr.mxu0 0.0
      %639 = vmatpush1.msra.mxu0 0.0
      %640 = vmatprep.subr.mxu0 0.0
      %641 = vmatpush1.msra.mxu0 0.0
      %642 = vmatprep.subr.mxu0 0.0
      %643 = vmatpush1.msra.mxu0 0.0
      %644 = vmatprep.subr.mxu0 0.0
      %645 = vmatpush1.msra.mxu0 0.0
      %646 = vmatprep.subr.mxu0 0.0
      %647 = vmatpush1.msra.mxu0 0.0
      %648 = vmatprep.subr.mxu0 0.0
      %649 = vmatpush1.msra.mxu0 0.0
      %650 = vmatprep.subr.mxu0 0.0
      %651 = vmatpush1.msra.mxu0 0.0
      %652 = vmatprep.subr.mxu0 0.0
      %653 = vmatpush1.msra.mxu0 0.0
      %654 = vmatprep.subr.mxu0 0.0
      %655 = vmatpush1.msra.mxu0 0.0
      %656 = vmatprep.subr.mxu0 0.0
      %657 = vmatpush1.msra.mxu0 0.0
      %658 = vmatprep.mubr.f32.mxu0 0.0
      %659 = vmatmul.mubr.f32.gmra.mrb[0].mxu0 %v592
      %v660 = vpop.f32.mrb[0].mxu0
      %v661 = vadd.f32 %v589, %v660
      %v662 = vpop.f32.mrb[0].mxu0
      %v663 = vadd.f32 %v589, %v662
      %664 = vdwg.mxu0
      %665 = vmatprep.subr.mxu0 0.0
      %666 = vmatpush1.msra.mxu0 %v518
      %667 = vmatprep.subr.mxu0 0.0
      %668 = vmatpush1.msra.mxu0 %v527
      %669 = vmatprep.subr.mxu0 0.0
      %670 = vmatpush1.msra.mxu0 %v536
      %671 = vmatprep.subr.mxu0 0.0
      %672 = vmatpush1.msra.mxu0 %v545
      %673 = vmatprep.subr.mxu0 0.0
      %674 = vmatpush1.msra.mxu0 %v511
      %675 = vmatprep.subr.mxu0 0.0
      %676 = vmatpush1.msra.mxu0 %v556
      %677 = vmatprep.subr.mxu0 0.0
      %678 = vmatpush1.msra.mxu0 %v565
      %679 = vmatprep.subr.mxu0 0.0
      %680 = vmatpush1.msra.mxu0 %v574
      %681 = vmatprep.subr.mxu0 0.0
      %682 = vmatpush1.msra.mxu0 %v583
      %683 = vmatprep.subr.mxu0 0.0
      %684 = vmatpush1.msra.mxu0 0.0
      %685 = vmatprep.subr.mxu0 0.0
      %686 = vmatpush1.msra.mxu0 0.0
      %687 = vmatprep.subr.mxu0 0.0
      %688 = vmatpush1.msra.mxu0 0.0
      %689 = vmatprep.subr.mxu0 0.0
      %690 = vmatpush1.msra.mxu0 0.0
      %691 = vmatprep.subr.mxu0 0.0
      %692 = vmatpush1.msra.mxu0 0.0
      %693 = vmatprep.subr.mxu0 0.0
      %694 = vmatpush1.msra.mxu0 0.0
      %695 = vmatprep.subr.mxu0 0.0
      %696 = vmatpush1.msra.mxu0 0.0
      %697 = vmatprep.subr.mxu0 0.0
      %698 = vmatpush1.msra.mxu0 0.0
      %699 = vmatprep.subr.mxu0 0.0
      %700 = vmatpush1.msra.mxu0 0.0
      %701 = vmatprep.subr.mxu0 0.0
      %702 = vmatpush1.msra.mxu0 0.0
      %703 = vmatprep.subr.mxu0 0.0
      %704 = vmatpush1.msra.mxu0 0.0
      %705 = vmatprep.subr.mxu0 0.0
      %706 = vmatpush1.msra.mxu0 0.0
      %707 = vmatprep.subr.mxu0 0.0
      %708 = vmatpush1.msra.mxu0 0.0
      %709 = vmatprep.subr.mxu0 0.0
      %710 = vmatpush1.msra.mxu0 0.0
      %711 = vmatprep.subr.mxu0 0.0
      %712 = vmatpush1.msra.mxu0 0.0
      %713 = vmatprep.subr.mxu0 0.0
      %714 = vmatpush1.msra.mxu0 0.0
      %715 = vmatprep.subr.mxu0 0.0
      %716 = vmatpush1.msra.mxu0 0.0
      %717 = vmatprep.subr.mxu0 0.0
      %718 = vmatpush1.msra.mxu0 0.0
      %719 = vmatprep.subr.mxu0 0.0
      %720 = vmatpush1.msra.mxu0 0.0
      %721 = vmatprep.subr.mxu0 0.0
      %722 = vmatpush1.msra.mxu0 0.0
      %723 = vmatprep.subr.mxu0 0.0
      %724 = vmatpush1.msra.mxu0 0.0
      %725 = vmatprep.subr.mxu0 0.0
      %726 = vmatpush1.msra.mxu0 0.0
      %727 = vmatprep.subr.mxu0 0.0
      %728 = vmatpush1.msra.mxu0 0.0
      %729 = vmatprep.mubr.f32.mxu0 0.0
      %730 = vmatmul.mubr.f32.gmra.mrb[0].mxu0 %v592
      %v731 = vpop.f32.mrb[0].mxu0
      %v732 = vadd.f32 %v589, %v731
      %v733 = vpop.f32.mrb[0].mxu0
      %734 = vdwg.mxu0
      %v735 = vadd.f32 %v661, %v253
      %v736 = vadd.f32 %v663, %v254
      %v737 = vadd.f32 %v732, %v255
      %v738 = vmax.f32 %v735, 0.0
      %v739 = vmax.f32 %v736, 0.0
      %v740 = vmax.f32 %v737, 0.0
      %v741 = vmul.f32 %v738, %v497
      %v742 = vmul.f32 %v739, %v501
      %v743 = vmul.f32 %v740, %v505
      %744 = vst [vmem:[%s251] sm:$0xff] %v741
      %745 = vst [vmem:[%s251 + $0x8] sm:$0xff] %v742
      %746 = vst [vmem:[%s251 + $0x10] sm:$0xff] %v743
      %p747 = scmp.lt.s32.totalorder %s17, 1
      %s748 = scalar_select %p747, %s17, 1
      %s749 = smul.addr %s748, 3
      %s750 = smul.addr %s749, 8
      %s751 = scalar_lea.vmem %s6, %s750
      // Predicated region
      $region45: #{residual_block_forward.1} parent=43 // pred_check
        %p752 = pneg %p166
      $region46: #{residual_block_forward.1} parent=43 // pred_check_branch
        %754 = sbr.rel (%p752) target = $region48
      $region47: #{residual_block_forward.1} parent=43 // pred_region
        _
      $region48: #{residual_block_forward.1} parent=43 // pred_fallthru
        _
    $region44: #{residual_block_forward.1} parent=5 // pred_fallthru
      _
    %p755 = scmp.le.s32.totalorder 2, %s12
    // Predicated region
    $region49: #{residual_block_forward.1} parent=5 // pred_check
      %p756 = pneg %p755
    $region50: #{residual_block_forward.1} parent=5 // pred_check_branch
      %758 = sbr.rel (%p756) target = $region52
    $region51: #{residual_block_forward.1} parent=5 // pred_region
      %s759 = ssub.s32 %s12, 2
      // Predicated region
      $region53: #{residual_block_forward.1} parent=51 // pred_check
        %p760 = pneg %p172
      $region54: #{residual_block_forward.1} parent=51 // pred_check_branch
        %762 = sbr.rel (%p760) target = $region56
      $region55: #{residual_block_forward.1} parent=51 // pred_region
        %p763 = scmp.lt.s32.totalorder %s18, 1
        %s764 = scalar_select %p763, %s18, 1
        %s765 = smul.addr %s764, 3
        %s766 = smul.addr %s765, 8
        %s767 = scalar_lea.vmem %s6, %s766
      $region56: #{residual_block_forward.1} parent=51 // pred_fallthru
        _
    $region52: #{residual_block_forward.1} parent=5 // pred_fallthru
      _
  $region6: #{residual_block_forward.1} parent=0 // loop_footer
    %s16 = sadd.s32 1, %s12
  $region7: #{residual_block_forward.1} parent=0 // loop_footer_branch
    %11 = sbr.rel target = $region3
  $region8: #{residual_block_forward.1} parent=0 // loop_exit
    _

</llo_original>
